<compile_context>
chip_gen: v7x
topology: tpu7x:2x2x1
jax: 0.10.0
libtpu: 0.0.40
codegen_flags: <defaults>
</compile_context>

<pallas_src>
import math

import jax
import jax.numpy as jnp
from jax.experimental import pallas as pl
from jax.experimental.pallas import tpu as pltpu

LEAKY_SLOPE = 0.1
LANES = 128


def _round_up(x, m):
    return (x + m - 1) // m * m


def _pick_tile_h(H, W, max_rows=1024):
    """Largest divisor TH of H with TH*W <= max_rows and (TH*W) % 8 == 0.
    Excludes H itself when possible so there are >= 2 row tiles (pipelining,
    and so both TensorCores get work on v7x)."""
    best = None
    for cand in range(1, H):
        if H % cand == 0 and cand * W <= max_rows and (cand * W) % 8 == 0:
            best = cand
    return best if best is not None else H


def _make_conv_kernel(TH, W, Cin, Cout_p, relu, slope):
    P = TH * W
    K3 = 3 * Cin

    def kernel(x_ref, w_ref, b_ref, o_ref):
        # x_ref: (1, TH+2, W+2, Cin) bf16 -- this row tile + 1-row halo
        # w_ref: (3, 3*Cin, Cout_p)  bf16 -- taps grouped per ky (dx, cin fused)
        # b_ref: (1, Cout_p)         f32
        # o_ref: (1, TH*W, Cout_p)   f32  -- flattened (h, w) rows, lane-dense
        acc = None
        for dy in range(3):                                   # static unroll
            rows = x_ref[0, dy:dy + TH, :, :]                 # (TH, W+2, Cin) bf16
            # 3-way lane concat of the dx shifts, kept in bf16 end-to-end.
            lhs = jnp.concatenate(
                [rows[:, dx:dx + W, :] for dx in range(3)], axis=-1
            ).reshape(P, K3)                                  # (P, 3*Cin) bf16
            part = jnp.dot(lhs, w_ref[dy],
                           preferred_element_type=jnp.float32)
            acc = part if acc is None else acc + part
        acc = acc + b_ref[...]                                # f32 bias
        if relu:
            acc = jnp.where(acc >= 0, acc, slope * acc)       # LeakyReLU / ReLU
        o_ref[0] = acc

    return kernel


def conv3x3(x, w, b, relu=True, leaky=True):
    """nn.Conv2d(kernel_size=3, padding=1) (+ LeakyReLU(0.1)/ReLU).
    NHWC in/out.  w: (3, 3, Cin, Cout) float32 (HWIO), b: (Cout,) float32."""
    N, H, W, Cin = x.shape
    Cout = w.shape[-1]
    TH = _pick_tile_h(H, W)
    nt = H // TH
    Wp = W + 2
    Cout_p = _round_up(Cout, LANES)          # lane-dense output stores
    slope = LEAKY_SLOPE if leaky else 0.0

    # Pad spatially once, cast to bf16 (halves DMA bytes), then restructure
    # tile-major with a per-tile halo so the kernel's input block is one tile.
    xp = jnp.pad(x, ((0, 0), (1, 1), (1, 1), (0, 0))).astype(jnp.bfloat16)
    xt = jnp.stack([xp[:, i * TH:i * TH + TH + 2] for i in range(nt)], axis=1)
    xt = xt.reshape(N * nt, TH + 2, Wp, Cin)                  # (N*nt, TH+2, Wp, Cin)

    # Weights: HWIO -> (ky, kx*Cin, Cout), Cout zero-padded to 128 lanes.
    wt = jnp.pad(w.reshape(3, 3 * Cin, Cout),
                 ((0, 0), (0, 0), (0, Cout_p - Cout))).astype(jnp.bfloat16)
    bt = jnp.pad(b, (0, Cout_p - Cout)).reshape(1, Cout_p).astype(jnp.float32)

    cost = pl.CostEstimate(
        flops=2 * N * H * W * 9 * Cin * Cout_p,
        transcendentals=0,
        bytes_accessed=(xt.size * 2 + wt.size * 2 + bt.size * 4
                        + N * H * W * Cout_p * 4),
    )

    out = pl.pallas_call(
        _make_conv_kernel(TH, W, Cin, Cout_p, relu, slope),
        out_shape=jax.ShapeDtypeStruct((N, H * W, Cout_p), jnp.float32),
        grid=(N, nt),
        in_specs=[
            pl.BlockSpec((1, TH + 2, Wp, Cin),
                         lambda n, i: (n * nt + i, 0, 0, 0)),
            pl.BlockSpec((3, 3 * Cin, Cout_p), lambda n, i: (0, 0, 0)),
            pl.BlockSpec((1, Cout_p), lambda n, i: (0, 0)),
        ],
        out_specs=pl.BlockSpec((1, TH * W, Cout_p), lambda n, i: (n, i, 0)),
        compiler_params=pltpu.CompilerParams(
            dimension_semantics=("parallel", "parallel"),
        ),
        cost_estimate=cost,
    )(xt, wt, bt)
    return out[:, :, :Cout].reshape(N, H, W, Cout)


def conv_module_forward(x_nchw, weight_oihw, bias, relu=True, leaky=True):
    """Matches PyTorch `Conv(in, out, relu, leaky).forward`: NCHW input,
    nn.Conv2d weight layout (Cout, Cin, 3, 3)."""
    x = jnp.transpose(x_nchw, (0, 2, 3, 1))                   # NCHW -> NHWC
    w = jnp.transpose(weight_oihw, (2, 3, 1, 0))              # OIHW -> HWIO
    y = conv3x3(x, w, bias, relu=relu, leaky=leaky)
    return jnp.transpose(y, (0, 3, 1, 2))                     # NHWC -> NCHW


def reference_forward(x_nchw, weight_oihw, bias, relu=True, leaky=True):
    """Plain-XLA reference using the same bf16-quantised operands."""
    x = jnp.transpose(x_nchw, (0, 2, 3, 1)).astype(jnp.bfloat16).astype(jnp.float32)
    w = jnp.transpose(weight_oihw, (2, 3, 1, 0)).astype(jnp.bfloat16).astype(jnp.float32)
    y = jax.lax.conv_general_dilated(
        x, w, window_strides=(1, 1), padding=((1, 1), (1, 1)),
        dimension_numbers=("NHWC", "HWIO", "NHWC"))
    y = y + bias[None, None, None, :].astype(jnp.float32)
    if relu:
        slope = LEAKY_SLOPE if leaky else 0.0
        y = jnp.where(y >= 0, y, slope * y)
    return jnp.transpose(y, (0, 3, 1, 2))


if __name__ == "__main__":
    key = jax.random.PRNGKey(0)
    kx, kw, kb = jax.random.split(key, 3)

    # Shapes implied by the denoiser that uses Conv: first layer is 9 -> 48.
    N, Cin, Cout, H, W = 2, 9, 48, 16, 16
    x = jax.random.normal(kx, (N, Cin, H, W), jnp.float32)

    # kaiming_normal_(nonlinearity='leaky_relu') -> gain sqrt(2), fan_in = Cin*9
    fan_in = Cin * 9
    w = (math.sqrt(2.0) / math.sqrt(fan_in)) * jax.random.normal(
        kw, (Cout, Cin, 3, 3), jnp.float32)
    b = (1.0 / math.sqrt(fan_in)) * jax.random.uniform(
        kb, (Cout,), jnp.float32, -1.0, 1.0)

    fwd = jax.jit(conv_module_forward, static_argnames=("relu", "leaky"))
    out = jax.block_until_ready(fwd(x, w, b, relu=True, leaky=True))

    assert out.shape == (N, Cout, H, W), out.shape
    assert bool(jnp.all(jnp.isfinite(out)))

    ref = reference_forward(x, w, b, relu=True, leaky=True)
    err = float(jnp.max(jnp.abs(out - ref)))
    assert err < 2e-2, f"max abs err vs reference: {err}"
    print("KERNEL_OK")
</pallas_src>

<mosaic_0001>
module attributes {stable_mosaic.version = 11 : i64} {
  func.func @kernel(%arg0: i32, %arg1: i32, %arg2: memref<1x10x18x9xbf16, #tpu.memory_space<vmem>>, %arg3: memref<3x27x128xbf16, #tpu.memory_space<vmem>>, %arg4: memref<1x128xf32, #tpu.memory_space<vmem>>, %arg5: memref<1x128x128xf32, #tpu.memory_space<vmem>>) attributes {dimension_semantics = [#tpu.dimension_semantics<parallel>, #tpu.dimension_semantics<parallel>], iteration_bounds = array<i64: 2, 2>, scalar_prefetch = 0 : i64, scratch_operands = 0 : i64, tpu.core_type = #tpu.core_type<tc>, window_params = [{transform_indices = @transform_0, window_bounds = array<i64: 1, 10, 18, 9>}, {pipeline_mode = #tpu.pipeline_mode<synchronous>, transform_indices = @transform_1, window_bounds = array<i64: 3, 27, 128>}, {pipeline_mode = #tpu.pipeline_mode<synchronous>, transform_indices = @transform_2, window_bounds = array<i64: 1, 128>}, {transform_indices = @transform_3, window_bounds = array<i64: 1, 128, 128>}]} {
    %c0 = arith.constant 0 : index
    %c0_0 = arith.constant 0 : index
    %c0_1 = arith.constant 0 : index
    %c0_2 = arith.constant 0 : index
    %0 = vector.load %arg2[%c0, %c0_0, %c0_1, %c0_2] : memref<1x10x18x9xbf16, #tpu.memory_space<vmem>>, vector<1x8x18x9xbf16>
    %1 = vector.shape_cast %0 : vector<1x8x18x9xbf16> to vector<8x18x9xbf16>
    %2 = vector.extract_strided_slice %1 {offsets = [0, 0, 0], sizes = [8, 16, 9], strides = [1, 1, 1]} : vector<8x18x9xbf16> to vector<8x16x9xbf16>
    %3 = vector.extract_strided_slice %1 {offsets = [0, 1, 0], sizes = [8, 16, 9], strides = [1, 1, 1]} : vector<8x18x9xbf16> to vector<8x16x9xbf16>
    %4 = vector.extract_strided_slice %1 {offsets = [0, 2, 0], sizes = [8, 16, 9], strides = [1, 1, 1]} : vector<8x18x9xbf16> to vector<8x16x9xbf16>
    %5 = tpu.concatenate %2, %3, %4 in 2 : vector<8x16x9xbf16>, vector<8x16x9xbf16>, vector<8x16x9xbf16> -> vector<8x16x27xbf16>
    %6 = vector.shape_cast %5 : vector<8x16x27xbf16> to vector<128x27xbf16>
    %c0_3 = arith.constant 0 : index
    %c0_4 = arith.constant 0 : index
    %c0_5 = arith.constant 0 : index
    %7 = vector.load %arg3[%c0_3, %c0_4, %c0_5] : memref<3x27x128xbf16, #tpu.memory_space<vmem>>, vector<1x27x128xbf16>
    %8 = vector.shape_cast %7 : vector<1x27x128xbf16> to vector<27x128xbf16>
    %cst = arith.constant dense<0.000000e+00> : vector<128x128xf32>
    %9 = tpu.matmul %6, %8, %cst {dimension_numbers = #tpu.dot_dimension_numbers<[1], [0], [0], [1], [0, 0, 1, 1], [], []>} : vector<128x27xbf16>, vector<27x128xbf16>, vector<128x128xf32> -> vector<128x128xf32>
    %c0_6 = arith.constant 0 : index
    %c1 = arith.constant 1 : index
    %c0_7 = arith.constant 0 : index
    %c0_8 = arith.constant 0 : index
    %10 = vector.load %arg2[%c0_6, %c1, %c0_7, %c0_8] : memref<1x10x18x9xbf16, #tpu.memory_space<vmem>>, vector<1x8x18x9xbf16>
    %11 = vector.shape_cast %10 : vector<1x8x18x9xbf16> to vector<8x18x9xbf16>
    %12 = vector.extract_strided_slice %11 {offsets = [0, 0, 0], sizes = [8, 16, 9], strides = [1, 1, 1]} : vector<8x18x9xbf16> to vector<8x16x9xbf16>
    %13 = vector.extract_strided_slice %11 {offsets = [0, 1, 0], sizes = [8, 16, 9], strides = [1, 1, 1]} : vector<8x18x9xbf16> to vector<8x16x9xbf16>
    %14 = vector.extract_strided_slice %11 {offsets = [0, 2, 0], sizes = [8, 16, 9], strides = [1, 1, 1]} : vector<8x18x9xbf16> to vector<8x16x9xbf16>
    %15 = tpu.concatenate %12, %13, %14 in 2 : vector<8x16x9xbf16>, vector<8x16x9xbf16>, vector<8x16x9xbf16> -> vector<8x16x27xbf16>
    %16 = vector.shape_cast %15 : vector<8x16x27xbf16> to vector<128x27xbf16>
    %c1_9 = arith.constant 1 : index
    %c0_10 = arith.constant 0 : index
    %c0_11 = arith.constant 0 : index
    %17 = vector.load %arg3[%c1_9, %c0_10, %c0_11] : memref<3x27x128xbf16, #tpu.memory_space<vmem>>, vector<1x27x128xbf16>
    %18 = vector.shape_cast %17 : vector<1x27x128xbf16> to vector<27x128xbf16>
    %cst_12 = arith.constant dense<0.000000e+00> : vector<128x128xf32>
    %19 = tpu.matmul %16, %18, %cst_12 {dimension_numbers = #tpu.dot_dimension_numbers<[1], [0], [0], [1], [0, 0, 1, 1], [], []>} : vector<128x27xbf16>, vector<27x128xbf16>, vector<128x128xf32> -> vector<128x128xf32>
    %20 = arith.addf %9, %19 : vector<128x128xf32>
    %c0_13 = arith.constant 0 : index
    %c2 = arith.constant 2 : index
    %c0_14 = arith.constant 0 : index
    %c0_15 = arith.constant 0 : index
    %21 = vector.load %arg2[%c0_13, %c2, %c0_14, %c0_15] : memref<1x10x18x9xbf16, #tpu.memory_space<vmem>>, vector<1x8x18x9xbf16>
    %22 = vector.shape_cast %21 : vector<1x8x18x9xbf16> to vector<8x18x9xbf16>
    %23 = vector.extract_strided_slice %22 {offsets = [0, 0, 0], sizes = [8, 16, 9], strides = [1, 1, 1]} : vector<8x18x9xbf16> to vector<8x16x9xbf16>
    %24 = vector.extract_strided_slice %22 {offsets = [0, 1, 0], sizes = [8, 16, 9], strides = [1, 1, 1]} : vector<8x18x9xbf16> to vector<8x16x9xbf16>
    %25 = vector.extract_strided_slice %22 {offsets = [0, 2, 0], sizes = [8, 16, 9], strides = [1, 1, 1]} : vector<8x18x9xbf16> to vector<8x16x9xbf16>
    %26 = tpu.concatenate %23, %24, %25 in 2 : vector<8x16x9xbf16>, vector<8x16x9xbf16>, vector<8x16x9xbf16> -> vector<8x16x27xbf16>
    %27 = vector.shape_cast %26 : vector<8x16x27xbf16> to vector<128x27xbf16>
    %c2_16 = arith.constant 2 : index
    %c0_17 = arith.constant 0 : index
    %c0_18 = arith.constant 0 : index
    %28 = vector.load %arg3[%c2_16, %c0_17, %c0_18] : memref<3x27x128xbf16, #tpu.memory_space<vmem>>, vector<1x27x128xbf16>
    %29 = vector.shape_cast %28 : vector<1x27x128xbf16> to vector<27x128xbf16>
    %cst_19 = arith.constant dense<0.000000e+00> : vector<128x128xf32>
    %30 = tpu.matmul %27, %29, %cst_19 {dimension_numbers = #tpu.dot_dimension_numbers<[1], [0], [0], [1], [0, 0, 1, 1], [], []>} : vector<128x27xbf16>, vector<27x128xbf16>, vector<128x128xf32> -> vector<128x128xf32>
    %31 = arith.addf %20, %30 : vector<128x128xf32>
    %c0_20 = arith.constant 0 : index
    %c0_21 = arith.constant 0 : index
    %32 = vector.load %arg4[%c0_20, %c0_21] : memref<1x128xf32, #tpu.memory_space<vmem>>, vector<1x128xf32>
    %33 = vector.broadcast %32 : vector<1x128xf32> to vector<128x128xf32>
    %34 = arith.addf %31, %33 : vector<128x128xf32>
    %cst_22 = arith.constant 0.000000e+00 : f32
    %35 = vector.broadcast %cst_22 : f32 to vector<128x128xf32>
    %36 = arith.cmpf oge, %34, %35 : vector<128x128xf32>
    %cst_23 = arith.constant 1.000000e-01 : f32
    %37 = vector.broadcast %cst_23 : f32 to vector<128x128xf32>
    %38 = arith.mulf %37, %34 : vector<128x128xf32>
    %39 = arith.select %36, %34, %38 : vector<128x128xi1>, vector<128x128xf32>
    %c0_24 = arith.constant 0 : index
    %c0_25 = arith.constant 0 : index
    %c0_26 = arith.constant 0 : index
    %40 = vector.load %arg5[%c0_24, %c0_25, %c0_26] : memref<1x128x128xf32, #tpu.memory_space<vmem>>, vector<1x128x128xf32>
    %41 = vector.shape_cast %40 : vector<1x128x128xf32> to vector<128x128xf32>
    %42 = vector.shape_cast %39 : vector<128x128xf32> to vector<1x128x128xf32>
    tpu.vector_store %arg5[%c0_24, %c0_25, %c0_26], %42 {strides = array<i32>} : memref<1x128x128xf32, #tpu.memory_space<vmem>>, vector<1x128x128xf32>,
    return
  }
  func.func @transform_0(%arg0: i32, %arg1: i32) -> (i32, i32, i32, i32) {
    %c2_i32 = arith.constant 2 : i32
    %0 = arith.muli %arg0, %c2_i32 : i32
    %1 = arith.addi %0, %arg1 : i32
    %c0_i32 = arith.constant 0 : i32
    %c0_i32_0 = arith.constant 0 : i32
    %c0_i32_1 = arith.constant 0 : i32
    %c0_i32_2 = arith.constant 0 : i32
    return %1, %c0_i32, %c0_i32_0, %c0_i32_1 : i32, i32, i32, i32
  }
  func.func @transform_1(%arg0: i32, %arg1: i32) -> (i32, i32, i32) {
    %c0_i32 = arith.constant 0 : i32
    %c0_i32_0 = arith.constant 0 : i32
    %c0_i32_1 = arith.constant 0 : i32
    %c0_i32_2 = arith.constant 0 : i32
    return %c0_i32, %c0_i32_0, %c0_i32_1 : i32, i32, i32
  }
  func.func @transform_2(%arg0: i32, %arg1: i32) -> (i32, i32) {
    %c0_i32 = arith.constant 0 : i32
    %c0_i32_0 = arith.constant 0 : i32
    %c0_i32_1 = arith.constant 0 : i32
    return %c0_i32, %c0_i32_0 : i32, i32
  }
  func.func @transform_3(%arg0: i32, %arg1: i32) -> (i32, i32, i32) {
    %c0_i32 = arith.constant 0 : i32
    %c0_i32_0 = arith.constant 0 : i32
    return %arg0, %arg1, %c0_i32 : i32, i32, i32
  }
}

</mosaic_0001>

<llo_original>
// kernel: conv_module_forward.1
$region0: #{conv_module_forward.1}
  #allocation0 [shape = 'u32[]', space=smem, size = 0x4, offset = 0x4, fixed_abs, tag = 'smem constant byte address 0x4 - core index']
  #allocation1 [shape = 'u32[144,128]{1,0:T(1,128)}', space=vmem, size = 0x12000, scoped, tag = 'internal scratch']
  %s0 = inlined_call_operand.vmem [shape: bf16[4,10,18,9], index: 0, kind: input, shape index: {}]
  %s1 = inlined_call_operand.vmem [shape: bf16[3,27,128], index: 1, kind: input, shape index: {}]
  %s2 = inlined_call_operand.vmem [shape: f32[1,128], index: 2, kind: input, shape index: {}]
  %s3 = inlined_call_operand.hbm [shape: f32[2,256,128], index: 3, kind: output, shape index: {}]
  %s4 = sld [smem:[#allocation0]]
  $region45: #{conv_module_forward.1} parent=0
    _
  %s6 = ssub.s32 1, %s4
  %s7 = scalar_select 0, %s6, %s4
  $region1: #{conv_module_forward.1} parent=0
    #allocation2 [shape = 'u8[131072]{0}', space=vmem, size = 0x20000, scoped, tag = 'output window, operand 0']
    #allocation3 [shape = 's32[2]{0}', space=sflag, size = 0x8, scoped, tag = 'scoped memory for conv_module_forward.1']
    %8 = vsyncpa [#allocation3], 0
    %s9 = scalar_lea.sflag [#allocation3], 1
    %10 = vsyncpa %s9, 0
    loop: start=0, step=1, limit=6
    $region2: #{conv_module_forward.1} parent=1 // loop_pre_header
      _
    $region3: #{conv_module_forward.1} parent=1 // loop_header
      %s12 = sphi 0, %s16
      %p13 = scmp.ge.s32.totalorder %s12, 6
      %s19 = sphi 0, %s31
      %s20 = sphi 0, %s27
      %s21 = sphi 0, %s19
      %s22 = sphi 0, %s20
      %s23 = sphi 0, %s21
      %s24 = sphi 0, %s22
      %s38 = sphi 0, %s40
      %s41 = sphi 0, %s38
      %s42 = sphi 0, %s41
      %s58 = sphi 0, %s42
      %s62 = sphi 0, %s62
      %s64 = sphi 0, %s62
      %s65 = sphi 0, %s64
      %s79 = sphi 0, %s65
      %s83 = sphi 0, %s83
      %s85 = sphi 0, %s83
      %s86 = sphi 0, %s85
      %s100 = sphi 0, %s86
      %s108 = sphi 0, %s110
      %s111 = sphi 0, %s108
      %s112 = sphi 0, %s111
      %s128 = sphi 0, %s112
    $region4: #{conv_module_forward.1} parent=1 // loop_header_branch
      %15 = sbr.rel (%p13) target = $region8
    $region5: #{conv_module_forward.1} parent=1 // loop_body
      %s17 = ssub.s32 %s12, 1
      %s18 = ssub.s32 %s12, 2
      %s25 = sadd.s32 1, %s20
      %p26 = scmp.ge.s32.totalorder %s25, 2
      %s27 = scalar_select %p26, 0, %s25
      %s28 = sadd.s32 1, %s19
      %s29 = scalar_select %p26, %s28, %s19
      %p30 = scmp.ge.s32.totalorder %s29, 2
      %s31 = scalar_select %p30, 0, %s29
      %s32 = smul.u32 %s19, 2
      %s33 = sadd.s32 %s32, %s20
      %s34 = smul.u32 %s31, 2
      %s35 = sadd.s32 %s34, %s27
      %s36 = ssub.s32 %s33, %s35
      %p37 = scmp.eq.s32.totalorder %s36, 0
      %s39 = sadd.s32 %s38, 1
      %s40 = scalar_select %p37, %s38, %s39
      %p43 = pneg %p37
      %p44 = scmp.eq.s32.totalorder %s12, 3
      %p45 = por %p43, %p44
      %p46 = scmp.ne.s32.totalorder %s38, %s41
      %p47 = scmp.eq.s32.totalorder %s12, 0
      %p48 = por %p46, %p47
      %p49 = scmp.ne.s32.totalorder %s38, %s41
      %p50 = scmp.eq.s32.totalorder %s17, 3
      %p51 = por %p49, %p50
      %p52 = scmp.ne.s32.totalorder %s41, %s42
      %p53 = scmp.eq.s32.totalorder %s17, 0
      %p54 = por %p52, %p53
      %p55 = scmp.ne.s32.totalorder %s41, %s42
      %p56 = scmp.eq.s32.totalorder %s18, 3
      %p57 = por %p55, %p56
      %p59 = scmp.ne.s32.totalorder %s42, %s58
      %p60 = scmp.eq.s32.totalorder %s18, 0
      %p61 = por %p59, %p60
      %s63 = sadd.s32 %s62, 1
      %p66 = scmp.eq.s32.totalorder %s12, 3
      %p67 = scmp.ne.s32.totalorder %s62, %s64
      %p68 = scmp.eq.s32.totalorder %s12, 0
      %p69 = por %p67, %p68
      %p70 = scmp.ne.s32.totalorder %s62, %s64
      %p71 = scmp.eq.s32.totalorder %s17, 3
      %p72 = por %p70, %p71
      %p73 = scmp.ne.s32.totalorder %s64, %s65
      %p74 = scmp.eq.s32.totalorder %s17, 0
      %p75 = por %p73, %p74
      %p76 = scmp.ne.s32.totalorder %s64, %s65
      %p77 = scmp.eq.s32.totalorder %s18, 3
      %p78 = por %p76, %p77
      %p80 = scmp.ne.s32.totalorder %s65, %s79
      %p81 = scmp.eq.s32.totalorder %s18, 0
      %p82 = por %p80, %p81
      %s84 = sadd.s32 %s83, 1
      %p87 = scmp.eq.s32.totalorder %s12, 3
      %p88 = scmp.ne.s32.totalorder %s83, %s85
      %p89 = scmp.eq.s32.totalorder %s12, 0
      %p90 = por %p88, %p89
      %p91 = scmp.ne.s32.totalorder %s83, %s85
      %p92 = scmp.eq.s32.totalorder %s17, 3
      %p93 = por %p91, %p92
      %p94 = scmp.ne.s32.totalorder %s85, %s86
      %p95 = scmp.eq.s32.totalorder %s17, 0
      %p96 = por %p94, %p95
      %p97 = scmp.ne.s32.totalorder %s85, %s86
      %p98 = scmp.eq.s32.totalorder %s18, 3
      %p99 = por %p97, %p98
      %p101 = scmp.ne.s32.totalorder %s86, %s100
      %p102 = scmp.eq.s32.totalorder %s18, 0
      %p103 = por %p101, %p102
      %s104 = ssub.s32 %s19, %s31
      %s105 = ssub.s32 %s20, %s27
      %s106 = sor.u32 %s104, %s105
      %p107 = scmp.eq.s32.totalorder %s106, 0
      %s109 = sadd.s32 %s108, 1
      %s110 = scalar_select %p107, %s108, %s109
      %p113 = pneg %p107
      %p114 = scmp.eq.s32.totalorder %s12, 3
      %p115 = por %p113, %p114
      %p116 = scmp.ne.s32.totalorder %s108, %s111
      %p117 = scmp.eq.s32.totalorder %s12, 0
      %p118 = por %p116, %p117
      %p119 = scmp.ne.s32.totalorder %s108, %s111
      %p120 = scmp.eq.s32.totalorder %s17, 3
      %p121 = por %p119, %p120
      %p122 = scmp.ne.s32.totalorder %s111, %s112
      %p123 = scmp.eq.s32.totalorder %s17, 0
      %p124 = por %p122, %p123
      %p125 = scmp.ne.s32.totalorder %s111, %s112
      %p126 = scmp.eq.s32.totalorder %s18, 3
      %p127 = por %p125, %p126
      %p129 = scmp.ne.s32.totalorder %s112, %s128
      %p130 = scmp.eq.s32.totalorder %s18, 0
      %p131 = por %p129, %p130
      %p132 = scmp.le.s32.totalorder 1, %s12
      %p133 = scmp.lt.s32.totalorder %s12, 5
      %p134 = pnand %p132, %p133
      %p135 = pneg %p134
      // Predicated region
      $region9: #{conv_module_forward.1} parent=5 // pred_check
        _
      $region10: #{conv_module_forward.1} parent=5 // pred_check_branch
        %137 = sbr.rel (%p134) target = $region12
      $region11: #{conv_module_forward.1} parent=5 // pred_region
        %s138 = ssub.s32 %s12, 1
        // Predicated region
        $region13: #{conv_module_forward.1} parent=11 // pred_check
          %p139 = pneg %p75
        $region14: #{conv_module_forward.1} parent=11 // pred_check_branch
          %141 = sbr.rel (%p139) target = $region16
        $region15: #{conv_module_forward.1} parent=11 // pred_region
          _
        $region16: #{conv_module_forward.1} parent=11 // pred_fallthru
          _
        // Predicated region
        $region17: #{conv_module_forward.1} parent=11 // pred_check
          %p142 = pneg %p96
        $region18: #{conv_module_forward.1} parent=11 // pred_check_branch
          %144 = sbr.rel (%p142) target = $region20
        $region19: #{conv_module_forward.1} parent=11 // pred_region
          _
        $region20: #{conv_module_forward.1} parent=11 // pred_fallthru
          _
      $region12: #{conv_module_forward.1} parent=5 // pred_fallthru
        _
      %p145 = scmp.lt.s32.totalorder %s12, 4
      // Predicated region
      $region21: #{conv_module_forward.1} parent=5 // pred_check
        %p146 = pneg %p145
      $region22: #{conv_module_forward.1} parent=5 // pred_check_branch
        %148 = sbr.rel (%p146) target = $region24
      $region23: #{conv_module_forward.1} parent=5 // pred_region
        // Predicated region
        $region25: #{conv_module_forward.1} parent=23 // pred_check
          %p149 = pneg %p48
        $region26: #{conv_module_forward.1} parent=23 // pred_check_branch
          %151 = sbr.rel (%p149) target = $region28
        $region27: #{conv_module_forward.1} parent=23 // pred_region
          %s152 = smul.u32 %s19, 2
          %s153 = sadd.s32 %s152, %s20
          %p154 = scmp.lt.s32.totalorder %s153, 3
          %s155 = scalar_select %p154, %s153, 3
          %s156 = smul.addr %s155, 30
          %s157 = smul.addr %s156, 4
          %s158 = scalar_lea.vmem %s0, %s157
          %s159 = smul.u32 %s19, 2
          %s160 = sadd.s32 %s159, %s20
        $region28: #{conv_module_forward.1} parent=23 // pred_fallthru
          _
      $region24: #{conv_module_forward.1} parent=5 // pred_fallthru
        _
      %p161 = scmp.le.s32.totalorder 1, %s12
      %p162 = scmp.lt.s32.totalorder %s12, 5
      %p163 = pnand %p161, %p162
      %p164 = pneg %p163
      // Predicated region
      $region29: #{conv_module_forward.1} parent=5 // pred_check
        _
      $region30: #{conv_module_forward.1} parent=5 // pred_check_branch
        %166 = sbr.rel (%p163) target = $region32
      $region31: #{conv_module_forward.1} parent=5 // pred_region
        %s167 = ssub.s32 %s12, 1
        %s168 = smul.u32 %s21, 2
        %s169 = sadd.s32 %s168, %s22
        %p170 = scmp.lt.s32.totalorder %s169, 3
        %s171 = scalar_select %p170, %s169, 3
        %s172 = smul.addr %s171, 30
        %s173 = smul.addr %s172, 4
        %s174 = scalar_lea.vmem %s0, %s173
        %p175 = pneg %p54
        %p176 = pneg %p51
        %p177 = pneg %p75
        %p178 = pneg %p72
        %p179 = pneg %p96
        %p180 = pneg %p93
        %p181 = pneg %p124
        %p182 = pneg %p121
        %s183 = sand.u32 %s111, 1
        %s184 = scalar_lea.sflag [#allocation3], %s183
        %s185 = sand.u32 %s111, 1
        %s186 = smul.addr %s185, 128
        %s187 = scalar_lea.vmem [#allocation2], %s186
        %s188 = smul.u32 %s21, 2
        %s189 = sadd.s32 %s188, %s22
        %p190 = scmp.lt.s32.totalorder %s189, 3
        %s191 = scalar_select %p190, %s189, 3
        %s192 = smul.addr %s191, 30
        %s193 = smul.addr %s192, 4
        %s194 = scalar_lea.vmem %s0, %s193
        %s195 = smul.u32 %s21, 2
        %s196 = sadd.s32 %s195, %s22
        %s197 = smul.u32 16, %s22
        %v199 = vld [vmem:[%s194] sm:$0xf]
        %v200 = vld [vmem:[%s194 + $0x4] sm:$0xf]
        %v201 = vld [vmem:[%s194 + $0x8] sm:$0x1]
        %v202 = vld [vmem:[%s194 + $0xc] sm:$0xf]
        %v203 = vld [vmem:[%s194 + $0x10] sm:$0xf]
        %v204 = vld [vmem:[%s194 + $0x14] sm:$0x1]
        %v205 = vld [vmem:[%s194 + $0x18] sm:$0xf]
        %v206 = vld [vmem:[%s194 + $0x1c] sm:$0xf]
        %v207 = vld [vmem:[%s194 + $0x20] sm:$0x1]
        %v208 = vld [vmem:[%s194 + $0x24] sm:$0xf]
        %v209 = vld [vmem:[%s194 + $0x28] sm:$0xf]
        %v210 = vld [vmem:[%s194 + $0x2c] sm:$0x1]
        %v211 = vld [vmem:[%s194 + $0x30] sm:$0xf]
        %v212 = vld [vmem:[%s194 + $0x34] sm:$0xf]
        %v213 = vld [vmem:[%s194 + $0x38] sm:$0x1]
        %v214 = vld [vmem:[%s194 + $0x3c] sm:$0xf]
        %v215 = vld [vmem:[%s194 + $0x40] sm:$0xf]
        %v216 = vld [vmem:[%s194 + $0x44] sm:$0x1]
        %v217 = vld [vmem:[%s194 + $0x48] sm:$0xf]
        %v218 = vld [vmem:[%s194 + $0x4c] sm:$0xf]
        %v219 = vld [vmem:[%s194 + $0x50] sm:$0x1]
        %v220 = vld [vmem:[%s194 + $0x54] sm:$0xf]
        %v221 = vld [vmem:[%s194 + $0x58] sm:$0xf]
        %v222 = vld [vmem:[%s194 + $0x5c] sm:$0x1]
        %v239 = vunpack.c.l.b16 %v199
        %v240 = vunpack.c.l.b16 %v200
        %v241 = vunpack.c.l.b16 %v202
        %v242 = vunpack.c.l.b16 %v203
        %v243 = vunpack.c.l.b16 %v205
        %v244 = vunpack.c.l.b16 %v206
        %v245 = vunpack.c.l.b16 %v208
        %v246 = vunpack.c.l.b16 %v209
        %v247 = vunpack.c.l.b16 %v211
        %v248 = vunpack.c.l.b16 %v212
        %v249 = vunpack.c.l.b16 %v214
        %v250 = vunpack.c.l.b16 %v215
        %v251 = vunpack.c.l.b16 %v217
        %v252 = vunpack.c.l.b16 %v218
        %v253 = vunpack.c.l.b16 %v220
        %v254 = vunpack.c.l.b16 %v221
        %v255 = vpack.c.b16 %v240, %v239
        %v256 = vpack.c.b16 %v242, %v241
        %v257 = vpack.c.b16 %v244, %v243
        %v258 = vpack.c.b16 %v246, %v245
        %v259 = vpack.c.b16 %v248, %v247
        %v260 = vpack.c.b16 %v250, %v249
        %v261 = vpack.c.b16 %v252, %v251
        %v262 = vpack.c.b16 %v254, %v253
        %v271 = vunpack.c.l.b16 %v201
        %v272 = vunpack.c.l.b16 %v204
        %v273 = vunpack.c.l.b16 %v207
        %v274 = vunpack.c.l.b16 %v210
        %v275 = vunpack.c.l.b16 %v213
        %v276 = vunpack.c.l.b16 %v216
        %v277 = vunpack.c.l.b16 %v219
        %v278 = vunpack.c.l.b16 %v222
        %v279 = vpack.c.b16 %v271, %v271
        %v280 = vpack.c.b16 %v272, %v272
        %v281 = vpack.c.b16 %v273, %v273
        %v282 = vpack.c.b16 %v274, %v274
        %v283 = vpack.c.b16 %v275, %v275
        %v284 = vpack.c.b16 %v276, %v276
        %v285 = vpack.c.b16 %v277, %v277
        %v286 = vpack.c.b16 %v278, %v278
        %vm287 = vsmask.f32 7424
        %v289 = vshrl.u32 %v255, 16
        %v291 = vshll.u32 %v255, 16
        %v293 = vrot.slane %v291, 1
        %v294 = vor.u32 %v289, %v293
        %v296 = vshll.u32 %v279, 16
        %v298 = vrot.slane %v296, 1
        %v299 = vsel %vm287, %v294, %v298
        %v301 = vshrl.u32 %v256, 16
        %v303 = vshll.u32 %v256, 16
        %v305 = vrot.slane %v303, 1
        %v306 = vor.u32 %v301, %v305
        %v308 = vshll.u32 %v280, 16
        %v310 = vrot.slane %v308, 1
        %v311 = vsel %vm287, %v306, %v310
        %v313 = vshrl.u32 %v257, 16
        %v315 = vshll.u32 %v257, 16
        %v317 = vrot.slane %v315, 1
        %v318 = vor.u32 %v313, %v317
        %v320 = vshll.u32 %v281, 16
        %v322 = vrot.slane %v320, 1
        %v323 = vsel %vm287, %v318, %v322
        %v325 = vshrl.u32 %v258, 16
        %v327 = vshll.u32 %v258, 16
        %v329 = vrot.slane %v327, 1
        %v330 = vor.u32 %v325, %v329
        %v332 = vshll.u32 %v282, 16
        %v334 = vrot.slane %v332, 1
        %v335 = vsel %vm287, %v330, %v334
        %v337 = vshrl.u32 %v259, 16
        %v339 = vshll.u32 %v259, 16
        %v341 = vrot.slane %v339, 1
        %v342 = vor.u32 %v337, %v341
        %v344 = vshll.u32 %v283, 16
        %v346 = vrot.slane %v344, 1
        %v347 = vsel %vm287, %v342, %v346
        %v349 = vshrl.u32 %v260, 16
        %v351 = vshll.u32 %v260, 16
        %v353 = vrot.slane %v351, 1
        %v354 = vor.u32 %v349, %v353
        %v356 = vshll.u32 %v284, 16
        %v358 = vrot.slane %v356, 1
        %v359 = vsel %vm287, %v354, %v358
        %v361 = vshrl.u32 %v261, 16
        %v363 = vshll.u32 %v261, 16
        %v365 = vrot.slane %v363, 1
        %v366 = vor.u32 %v361, %v365
        %v368 = vshll.u32 %v285, 16
        %v370 = vrot.slane %v368, 1
        %v371 = vsel %vm287, %v366, %v370
        %v373 = vshrl.u32 %v262, 16
        %v375 = vshll.u32 %v262, 16
        %v377 = vrot.slane %v375, 1
        %v378 = vor.u32 %v373, %v377
        %v380 = vshll.u32 %v286, 16
        %v382 = vrot.slane %v380, 1
        %v383 = vsel %vm287, %v378, %v382
        %384 = vrot.lane.b32.xlu0 %v299, 9
        %v385 = vpop.permute.xlu0 %384
        %386 = vrot.lane.b32.xlu0 %v311, 9
        %v387 = vpop.permute.xlu0 %386
        %388 = vrot.lane.b32.xlu0 %v323, 9
        %v389 = vpop.permute.xlu0 %388
        %390 = vrot.lane.b32.xlu0 %v335, 9
        %v391 = vpop.permute.xlu0 %390
        %392 = vrot.lane.b32.xlu0 %v347, 9
        %v393 = vpop.permute.xlu0 %392
        %394 = vrot.lane.b32.xlu0 %v359, 9
        %v395 = vpop.permute.xlu0 %394
        %396 = vrot.lane.b32.xlu0 %v371, 9
        %v397 = vpop.permute.xlu0 %396
        %398 = vrot.lane.b32.xlu0 %v383, 9
        %v399 = vpop.permute.xlu0 %398
        %vm400 = vcmask 1046528
        %v401 = vrot.slane %v255, 1
        %v402 = vrot.slane %v279, 1
        %v403 = vsel %vm400, %v401, %v402
        %v404 = vrot.slane %v256, 1
        %v405 = vrot.slane %v280, 1
        %v406 = vsel %vm400, %v404, %v405
        %v407 = vrot.slane %v257, 1
        %v408 = vrot.slane %v281, 1
        %v409 = vsel %vm400, %v407, %v408
        %v410 = vrot.slane %v258, 1
        %v411 = vrot.slane %v282, 1
        %v412 = vsel %vm400, %v410, %v411
        %v413 = vrot.slane %v259, 1
        %v414 = vrot.slane %v283, 1
        %v415 = vsel %vm400, %v413, %v414
        %v416 = vrot.slane %v260, 1
        %v417 = vrot.slane %v284, 1
        %v418 = vsel %vm400, %v416, %v417
        %v419 = vrot.slane %v261, 1
        %v420 = vrot.slane %v285, 1
        %v421 = vsel %vm400, %v419, %v420
        %v422 = vrot.slane %v262, 1
        %v423 = vrot.slane %v286, 1
        %v424 = vsel %vm400, %v422, %v423
        %425 = vrot.lane.b32.xlu0 %v403, 18
        %v426 = vpop.permute.xlu0 %425
        %427 = vrot.lane.b32.xlu0 %v406, 18
        %v428 = vpop.permute.xlu0 %427
        %429 = vrot.lane.b32.xlu0 %v409, 18
        %v430 = vpop.permute.xlu0 %429
        %431 = vrot.lane.b32.xlu0 %v412, 18
        %v432 = vpop.permute.xlu0 %431
        %433 = vrot.lane.b32.xlu0 %v415, 18
        %v434 = vpop.permute.xlu0 %433
        %435 = vrot.lane.b32.xlu0 %v418, 18
        %v436 = vpop.permute.xlu0 %435
        %437 = vrot.lane.b32.xlu0 %v421, 18
        %v438 = vpop.permute.xlu0 %437
        %439 = vrot.lane.b32.xlu0 %v424, 18
        %v440 = vpop.permute.xlu0 %439
        %vm441 = vcmask 72704
        %v443 = vsel %vm441, %v255, %v385
        %v445 = vsel %vm441, %v256, %v387
        %v447 = vsel %vm441, %v257, %v389
        %v449 = vsel %vm441, %v258, %v391
        %v451 = vsel %vm441, %v259, %v393
        %v453 = vsel %vm441, %v260, %v395
        %v455 = vsel %vm441, %v261, %v397
        %v457 = vsel %vm441, %v262, %v399
        %vm458 = vcmask 146432
        %v460 = vsel %vm458, %v443, %v426
        %v462 = vsel %vm458, %v445, %v428
        %v464 = vsel %vm458, %v447, %v430
        %v466 = vsel %vm458, %v449, %v432
        %v468 = vsel %vm458, %v451, %v434
        %v470 = vsel %vm458, %v453, %v436
        %v472 = vsel %vm458, %v455, %v438
        %v474 = vsel %vm458, %v457, %v440
        %v475 = vld [vmem:[%s1] sm:$0xf]
        %v476 = vld [vmem:[%s1 + $0x4] sm:$0xf]
        %v477 = vld [vmem:[%s1 + $0x8] sm:$0xf]
        %v478 = vld [vmem:[%s1 + $0xc] sm:$0x3]
        %s479 = scalar_lea.vmem %s194, 12
        %v480 = vld [vmem:[%s479] sm:$0xf]
        %v481 = vld [vmem:[%s479 + $0x4] sm:$0xf]
        %v482 = vld [vmem:[%s479 + $0x8] sm:$0x1]
        %v483 = vld [vmem:[%s479 + $0xc] sm:$0xf]
        %v484 = vld [vmem:[%s479 + $0x10] sm:$0xf]
        %v485 = vld [vmem:[%s479 + $0x14] sm:$0x1]
        %v486 = vld [vmem:[%s479 + $0x18] sm:$0xf]
        %v487 = vld [vmem:[%s479 + $0x1c] sm:$0xf]
        %v488 = vld [vmem:[%s479 + $0x20] sm:$0x1]
        %v489 = vld [vmem:[%s479 + $0x24] sm:$0xf]
        %v490 = vld [vmem:[%s479 + $0x28] sm:$0xf]
        %v491 = vld [vmem:[%s479 + $0x2c] sm:$0x1]
        %v492 = vld [vmem:[%s479 + $0x30] sm:$0xf]
        %v493 = vld [vmem:[%s479 + $0x34] sm:$0xf]
        %v494 = vld [vmem:[%s479 + $0x38] sm:$0x1]
        %v495 = vld [vmem:[%s479 + $0x3c] sm:$0xf]
        %v496 = vld [vmem:[%s479 + $0x40] sm:$0xf]
        %v497 = vld [vmem:[%s479 + $0x44] sm:$0x1]
        %v498 = vld [vmem:[%s479 + $0x48] sm:$0xf]
        %v499 = vld [vmem:[%s479 + $0x4c] sm:$0xf]
        %v500 = vld [vmem:[%s479 + $0x50] sm:$0x1]
        %v501 = vld [vmem:[%s479 + $0x54] sm:$0xf]
        %v502 = vld [vmem:[%s479 + $0x58] sm:$0xf]
        %v503 = vld [vmem:[%s479 + $0x5c] sm:$0x1]
        %v520 = vunpack.c.l.b16 %v480
        %v521 = vunpack.c.l.b16 %v481
        %v522 = vunpack.c.l.b16 %v483
        %v523 = vunpack.c.l.b16 %v484
        %v524 = vunpack.c.l.b16 %v486
        %v525 = vunpack.c.l.b16 %v487
        %v526 = vunpack.c.l.b16 %v489
        %v527 = vunpack.c.l.b16 %v490
        %v528 = vunpack.c.l.b16 %v492
        %v529 = vunpack.c.l.b16 %v493
        %v530 = vunpack.c.l.b16 %v495
        %v531 = vunpack.c.l.b16 %v496
        %v532 = vunpack.c.l.b16 %v498
        %v533 = vunpack.c.l.b16 %v499
        %v534 = vunpack.c.l.b16 %v501
        %v535 = vunpack.c.l.b16 %v502
        %v536 = vpack.c.b16 %v521, %v520
        %v537 = vpack.c.b16 %v523, %v522
        %v538 = vpack.c.b16 %v525, %v524
        %v539 = vpack.c.b16 %v527, %v526
        %v540 = vpack.c.b16 %v529, %v528
        %v541 = vpack.c.b16 %v531, %v530
        %v542 = vpack.c.b16 %v533, %v532
        %v543 = vpack.c.b16 %v535, %v534
        %v552 = vunpack.c.l.b16 %v482
        %v553 = vunpack.c.l.b16 %v485
        %v554 = vunpack.c.l.b16 %v488
        %v555 = vunpack.c.l.b16 %v491
        %v556 = vunpack.c.l.b16 %v494
        %v557 = vunpack.c.l.b16 %v497
        %v558 = vunpack.c.l.b16 %v500
        %v559 = vunpack.c.l.b16 %v503
        %v560 = vpack.c.b16 %v552, %v552
        %v561 = vpack.c.b16 %v553, %v553
        %v562 = vpack.c.b16 %v554, %v554
        %v563 = vpack.c.b16 %v555, %v555
        %v564 = vpack.c.b16 %v556, %v556
        %v565 = vpack.c.b16 %v557, %v557
        %v566 = vpack.c.b16 %v558, %v558
        %v567 = vpack.c.b16 %v559, %v559
        %v569 = vshrl.u32 %v536, 16
        %v571 = vshll.u32 %v536, 16
        %v573 = vrot.slane %v571, 1
        %v574 = vor.u32 %v569, %v573
        %v576 = vshll.u32 %v560, 16
        %v578 = vrot.slane %v576, 1
        %v579 = vsel %vm287, %v574, %v578
        %v581 = vshrl.u32 %v537, 16
        %v583 = vshll.u32 %v537, 16
        %v585 = vrot.slane %v583, 1
        %v586 = vor.u32 %v581, %v585
        %v588 = vshll.u32 %v561, 16
        %v590 = vrot.slane %v588, 1
        %v591 = vsel %vm287, %v586, %v590
        %v593 = vshrl.u32 %v538, 16
        %v595 = vshll.u32 %v538, 16
        %v597 = vrot.slane %v595, 1
        %v598 = vor.u32 %v593, %v597
        %v600 = vshll.u32 %v562, 16
        %v602 = vrot.slane %v600, 1
        %v603 = vsel %vm287, %v598, %v602
        %v605 = vshrl.u32 %v539, 16
        %v607 = vshll.u32 %v539, 16
        %v609 = vrot.slane %v607, 1
        %v610 = vor.u32 %v605, %v609
        %v612 = vshll.u32 %v563, 16
        %v614 = vrot.slane %v612, 1
        %v615 = vsel %vm287, %v610, %v614
        %v617 = vshrl.u32 %v540, 16
        %v619 = vshll.u32 %v540, 16
        %v621 = vrot.slane %v619, 1
        %v622 = vor.u32 %v617, %v621
        %v624 = vshll.u32 %v564, 16
        %v626 = vrot.slane %v624, 1
        %v627 = vsel %vm287, %v622, %v626
        %v629 = vshrl.u32 %v541, 16
        %v631 = vshll.u32 %v541, 16
        %v633 = vrot.slane %v631, 1
        %v634 = vor.u32 %v629, %v633
        %v636 = vshll.u32 %v565, 16
        %v638 = vrot.slane %v636, 1
        %v639 = vsel %vm287, %v634, %v638
        %v641 = vshrl.u32 %v542, 16
        %v643 = vshll.u32 %v542, 16
        %v645 = vrot.slane %v643, 1
        %v646 = vor.u32 %v641, %v645
        %v648 = vshll.u32 %v566, 16
        %v650 = vrot.slane %v648, 1
        %v651 = vsel %vm287, %v646, %v650
        %v653 = vshrl.u32 %v543, 16
        %v655 = vshll.u32 %v543, 16
        %v657 = vrot.slane %v655, 1
        %v658 = vor.u32 %v653, %v657
        %v660 = vshll.u32 %v567, 16
        %v662 = vrot.slane %v660, 1
        %v663 = vsel %vm287, %v658, %v662
        %664 = vrot.lane.b32.xlu0 %v579, 9
        %v665 = vpop.permute.xlu0 %664
        %666 = vrot.lane.b32.xlu0 %v591, 9
        %v667 = vpop.permute.xlu0 %666
        %668 = vrot.lane.b32.xlu0 %v603, 9
        %v669 = vpop.permute.xlu0 %668
        %670 = vrot.lane.b32.xlu0 %v615, 9
        %v671 = vpop.permute.xlu0 %670
        %672 = vrot.lane.b32.xlu0 %v627, 9
        %v673 = vpop.permute.xlu0 %672
        %674 = vrot.lane.b32.xlu0 %v639, 9
        %v675 = vpop.permute.xlu0 %674
        %676 = vrot.lane.b32.xlu0 %v651, 9
        %v677 = vpop.permute.xlu0 %676
        %678 = vrot.lane.b32.xlu0 %v663, 9
        %v679 = vpop.permute.xlu0 %678
        %v680 = vrot.slane %v536, 1
        %v681 = vrot.slane %v560, 1
        %v682 = vsel %vm400, %v680, %v681
        %v683 = vrot.slane %v537, 1
        %v684 = vrot.slane %v561, 1
        %v685 = vsel %vm400, %v683, %v684
        %v686 = vrot.slane %v538, 1
        %v687 = vrot.slane %v562, 1
        %v688 = vsel %vm400, %v686, %v687
        %v689 = vrot.slane %v539, 1
        %v690 = vrot.slane %v563, 1
        %v691 = vsel %vm400, %v689, %v690
        %v692 = vrot.slane %v540, 1
        %v693 = vrot.slane %v564, 1
        %v694 = vsel %vm400, %v692, %v693
        %v695 = vrot.slane %v541, 1
        %v696 = vrot.slane %v565, 1
        %v697 = vsel %vm400, %v695, %v696
        %v698 = vrot.slane %v542, 1
        %v699 = vrot.slane %v566, 1
        %v700 = vsel %vm400, %v698, %v699
        %v701 = vrot.slane %v543, 1
        %v702 = vrot.slane %v567, 1
        %v703 = vsel %vm400, %v701, %v702
        %704 = vrot.lane.b32.xlu0 %v682, 18
        %v705 = vpop.permute.xlu0 %704
        %706 = vrot.lane.b32.xlu0 %v685, 18
        %v707 = vpop.permute.xlu0 %706
        %708 = vrot.lane.b32.xlu0 %v688, 18
        %v709 = vpop.permute.xlu0 %708
        %710 = vrot.lane.b32.xlu0 %v691, 18
        %v711 = vpop.permute.xlu0 %710
        %712 = vrot.lane.b32.xlu0 %v694, 18
        %v713 = vpop.permute.xlu0 %712
        %714 = vrot.lane.b32.xlu0 %v697, 18
        %v715 = vpop.permute.xlu0 %714
        %716 = vrot.lane.b32.xlu0 %v700, 18
        %v717 = vpop.permute.xlu0 %716
        %718 = vrot.lane.b32.xlu0 %v703, 18
        %v719 = vpop.permute.xlu0 %718
        %v721 = vsel %vm441, %v536, %v665
        %v723 = vsel %vm441, %v537, %v667
        %v725 = vsel %vm441, %v538, %v669
        %v727 = vsel %vm441, %v539, %v671
        %v729 = vsel %vm441, %v540, %v673
        %v731 = vsel %vm441, %v541, %v675
        %v733 = vsel %vm441, %v542, %v677
        %v735 = vsel %vm441, %v543, %v679
        %v737 = vsel %vm458, %v721, %v705
        %v739 = vsel %vm458, %v723, %v707
        %v741 = vsel %vm458, %v725, %v709
        %v743 = vsel %vm458, %v727, %v711
        %v745 = vsel %vm458, %v729, %v713
        %v747 = vsel %vm458, %v731, %v715
        %v749 = vsel %vm458, %v733, %v717
        %v751 = vsel %vm458, %v735, %v719
        %s752 = scalar_lea.vmem %s1, 16
        %v753 = vld [vmem:[%s752] sm:$0xf]
        %v754 = vld [vmem:[%s752 + $0x4] sm:$0xf]
        %v755 = vld [vmem:[%s752 + $0x8] sm:$0xf]
        %v756 = vld [vmem:[%s752 + $0xc] sm:$0x3]
        %v761 = vunpack.c.l.b16 %v753
        %v762 = vunpack.c.l.b16 %v754
        %v763 = vunpack.c.l.b16 %v755
        %v764 = vunpack.c.l.b16 %v756
        %v765 = vpack.c.b16 %v762, %v761
        %v766 = vpack.c.b16 %v764, %v763
        %vm768 = vcmask 220160
        %v769 = vsel %vm768, %v737, 0
        %v771 = vsel %vm768, %v739, 0
        %v773 = vsel %vm768, %v741, 0
        %v775 = vsel %vm768, %v743, 0
        %v777 = vsel %vm768, %v745, 0
        %v779 = vsel %vm768, %v747, 0
        %v781 = vsel %vm768, %v749, 0
        %v783 = vsel %vm768, %v751, 0
        %vm785 = vcmask 1044480
        %vm786 = vcmask 1045504
        %v787 = vsel %vm785, 4294967295, 65535
        %v788 = vsel %vm786, %v787, 0
        %v790 = vand.u32 %v766, %v788
        %792 = vmatprep.subr.bf16.mxu0 0
        %793 = vmatpush1.bf16.msra.mxu0 %v765
        %794 = vmatprep.subr.bf16.mxu0 0
        %795 = vmatpush1.bf16.msra.mxu0 %v790
        %796 = vmatprep.subr.bf16.mxu0 0
        %797 = vmatpush1.bf16.msra.mxu0 0
        %798 = vmatprep.subr.bf16.mxu0 0
        %799 = vmatpush1.bf16.msra.mxu0 0
        %800 = vmatprep.subr.bf16.mxu0 0
        %801 = vmatpush1.bf16.msra.mxu0 0
        %802 = vmatprep.subr.bf16.mxu0 0
        %803 = vmatpush1.bf16.msra.mxu0 0
        %804 = vmatprep.subr.bf16.mxu0 0
        %805 = vmatpush1.bf16.msra.mxu0 0
        %806 = vmatprep.subr.bf16.mxu0 0
        %807 = vmatpush1.bf16.msra.mxu0 0
        %808 = vmatprep.subr.bf16.mxu0 0
        %809 = vmatpush1.bf16.msra.mxu0 0
        %810 = vmatprep.subr.bf16.mxu0 0
        %811 = vmatpush1.bf16.msra.mxu0 0
        %812 = vmatprep.subr.bf16.mxu0 0
        %813 = vmatpush1.bf16.msra.mxu0 0
        %814 = vmatprep.subr.bf16.mxu0 0
        %815 = vmatpush1.bf16.msra.mxu0 0
        %816 = vmatprep.subr.bf16.mxu0 0
        %817 = vmatpush1.bf16.msra.mxu0 0
        %818 = vmatprep.subr.bf16.mxu0 0
        %819 = vmatpush1.bf16.msra.mxu0 0
        %820 = vmatprep.subr.bf16.mxu0 0
        %821 = vmatpush1.bf16.msra.mxu0 0
        %822 = vmatprep.subr.bf16.mxu0 0
        %823 = vmatpush1.bf16.msra.mxu0 0
        %824 = vmatprep.mubr.bf16.mxu0 0
        %825 = vmatmul.mubr.bf16.gmra.mrb[0].mxu0 %v769
        %v826 = vpop.f32.mrb[0].mxu0
        %v827 = vadd.f32 0.0, %v826
        %v828 = vpop.f32.mrb[0].mxu0
        %v829 = vpop.f32.mrb[0].mxu0
        %v830 = vadd.f32 0.0, %v829
        %v831 = vpop.f32.mrb[0].mxu0
        %832 = vmatprep.mubr.bf16.mxu0 0
        %833 = vmatmul.mubr.bf16.gmra.mrb[0].mxu0 %v771
        %v834 = vpop.f32.mrb[0].mxu0
        %v835 = vadd.f32 0.0, %v834
        %v836 = vpop.f32.mrb[0].mxu0
        %v837 = vpop.f32.mrb[0].mxu0
        %v838 = vadd.f32 0.0, %v837
        %v839 = vpop.f32.mrb[0].mxu0
        %840 = vmatprep.mubr.bf16.mxu0 0
        %841 = vmatmul.mubr.bf16.gmra.mrb[0].mxu0 %v773
        %v842 = vpop.f32.mrb[0].mxu0
        %v843 = vadd.f32 0.0, %v842
        %v844 = vpop.f32.mrb[0].mxu0
        %v845 = vpop.f32.mrb[0].mxu0
        %v846 = vadd.f32 0.0, %v845
        %v847 = vpop.f32.mrb[0].mxu0
        %848 = vmatprep.mubr.bf16.mxu0 0
        %849 = vmatmul.mubr.bf16.gmra.mrb[0].mxu0 %v775
        %v850 = vpop.f32.mrb[0].mxu0
        %v851 = vadd.f32 0.0, %v850
        %v852 = vpop.f32.mrb[0].mxu0
        %v853 = vpop.f32.mrb[0].mxu0
        %v854 = vadd.f32 0.0, %v853
        %v855 = vpop.f32.mrb[0].mxu0
        %856 = vmatprep.mubr.bf16.mxu0 0
        %857 = vmatmul.mubr.bf16.gmra.mrb[0].mxu0 %v777
        %v858 = vpop.f32.mrb[0].mxu0
        %v859 = vadd.f32 0.0, %v858
        %v860 = vpop.f32.mrb[0].mxu0
        %v861 = vpop.f32.mrb[0].mxu0
        %v862 = vadd.f32 0.0, %v861
        %v863 = vpop.f32.mrb[0].mxu0
        %864 = vmatprep.mubr.bf16.mxu0 0
        %865 = vmatmul.mubr.bf16.gmra.mrb[0].mxu0 %v779
        %v866 = vpop.f32.mrb[0].mxu0
        %v867 = vadd.f32 0.0, %v866
        %v868 = vpop.f32.mrb[0].mxu0
        %v869 = vpop.f32.mrb[0].mxu0
        %v870 = vadd.f32 0.0, %v869
        %v871 = vpop.f32.mrb[0].mxu0
        %872 = vmatprep.mubr.bf16.mxu0 0
        %873 = vmatmul.mubr.bf16.gmra.mrb[0].mxu0 %v781
        %v874 = vpop.f32.mrb[0].mxu0
        %v875 = vadd.f32 0.0, %v874
        %v876 = vpop.f32.mrb[0].mxu0
        %v877 = vpop.f32.mrb[0].mxu0
        %v878 = vadd.f32 0.0, %v877
        %v879 = vpop.f32.mrb[0].mxu0
        %880 = vmatprep.mubr.bf16.mxu0 0
        %881 = vmatmul.mubr.bf16.gmra.mrb[0].mxu0 %v783
        %v882 = vpop.f32.mrb[0].mxu0
        %v883 = vadd.f32 0.0, %v882
        %v884 = vpop.f32.mrb[0].mxu0
        %v885 = vpop.f32.mrb[0].mxu0
        %v886 = vadd.f32 0.0, %v885
        %v887 = vpop.f32.mrb[0].mxu0
        %888 = vdwg.mxu0
        %v893 = vunpack.c.l.b16 %v475
        %v894 = vunpack.c.l.b16 %v476
        %v895 = vunpack.c.l.b16 %v477
        %v896 = vunpack.c.l.b16 %v478
        %v897 = vpack.c.b16 %v894, %v893
        %v898 = vpack.c.b16 %v896, %v895
        %v900 = vsel %vm768, %v460, 0
        %v902 = vsel %vm768, %v462, 0
        %v904 = vsel %vm768, %v464, 0
        %v906 = vsel %vm768, %v466, 0
        %v908 = vsel %vm768, %v468, 0
        %v910 = vsel %vm768, %v470, 0
        %v912 = vsel %vm768, %v472, 0
        %v914 = vsel %vm768, %v474, 0
        %v917 = vand.u32 %v898, %v788
        %919 = vmatprep.subr.bf16.mxu0 0
        %920 = vmatpush1.bf16.msra.mxu0 %v897
        %921 = vmatprep.subr.bf16.mxu0 0
        %922 = vmatpush1.bf16.msra.mxu0 %v917
        %923 = vmatprep.subr.bf16.mxu0 0
        %924 = vmatpush1.bf16.msra.mxu0 0
        %925 = vmatprep.subr.bf16.mxu0 0
        %926 = vmatpush1.bf16.msra.mxu0 0
        %927 = vmatprep.subr.bf16.mxu0 0
        %928 = vmatpush1.bf16.msra.mxu0 0
        %929 = vmatprep.subr.bf16.mxu0 0
        %930 = vmatpush1.bf16.msra.mxu0 0
        %931 = vmatprep.subr.bf16.mxu0 0
        %932 = vmatpush1.bf16.msra.mxu0 0
        %933 = vmatprep.subr.bf16.mxu0 0
        %934 = vmatpush1.bf16.msra.mxu0 0
        %935 = vmatprep.subr.bf16.mxu0 0
        %936 = vmatpush1.bf16.msra.mxu0 0
        %937 = vmatprep.subr.bf16.mxu0 0
        %938 = vmatpush1.bf16.msra.mxu0 0
        %939 = vmatprep.subr.bf16.mxu0 0
        %940 = vmatpush1.bf16.msra.mxu0 0
        %941 = vmatprep.subr.bf16.mxu0 0
        %942 = vmatpush1.bf16.msra.mxu0 0
        %943 = vmatprep.subr.bf16.mxu0 0
        %944 = vmatpush1.bf16.msra.mxu0 0
        %945 = vmatprep.subr.bf16.mxu0 0
        %946 = vmatpush1.bf16.msra.mxu0 0
        %947 = vmatprep.subr.bf16.mxu0 0
        %948 = vmatpush1.bf16.msra.mxu0 0
        %949 = vmatprep.subr.bf16.mxu0 0
        %950 = vmatpush1.bf16.msra.mxu0 0
        %951 = vmatprep.mubr.bf16.mxu0 0
        %952 = vmatmul.mubr.bf16.gmra.mrb[0].mxu0 %v900
        %v953 = vpop.f32.mrb[0].mxu0
        %v954 = vadd.f32 %v827, %v953
        %v955 = vpop.f32.mrb[0].mxu0
        %v956 = vpop.f32.mrb[0].mxu0
        %v957 = vadd.f32 %v830, %v956
        %v958 = vpop.f32.mrb[0].mxu0
        %959 = vmatprep.mubr.bf16.mxu0 0
        %960 = vmatmul.mubr.bf16.gmra.mrb[0].mxu0 %v902
        %v961 = vpop.f32.mrb[0].mxu0
        %v962 = vadd.f32 %v835, %v961
        %v963 = vpop.f32.mrb[0].mxu0
        %v964 = vpop.f32.mrb[0].mxu0
        %v965 = vadd.f32 %v838, %v964
        %v966 = vpop.f32.mrb[0].mxu0
        %967 = vmatprep.mubr.bf16.mxu0 0
        %968 = vmatmul.mubr.bf16.gmra.mrb[0].mxu0 %v904
        %v969 = vpop.f32.mrb[0].mxu0
        %v970 = vadd.f32 %v843, %v969
        %v971 = vpop.f32.mrb[0].mxu0
        %v972 = vpop.f32.mrb[0].mxu0
        %v973 = vadd.f32 %v846, %v972
        %v974 = vpop.f32.mrb[0].mxu0
        %975 = vmatprep.mubr.bf16.mxu0 0
        %976 = vmatmul.mubr.bf16.gmra.mrb[0].mxu0 %v906
        %v977 = vpop.f32.mrb[0].mxu0
        %v978 = vadd.f32 %v851, %v977
        %v979 = vpop.f32.mrb[0].mxu0
        %v980 = vpop.f32.mrb[0].mxu0
        %v981 = vadd.f32 %v854, %v980
        %v982 = vpop.f32.mrb[0].mxu0
        %983 = vmatprep.mubr.bf16.mxu0 0
        %984 = vmatmul.mubr.bf16.gmra.mrb[0].mxu0 %v908
        %v985 = vpop.f32.mrb[0].mxu0
        %v986 = vadd.f32 %v859, %v985
        %v987 = vpop.f32.mrb[0].mxu0
        %v988 = vpop.f32.mrb[0].mxu0
        %v989 = vadd.f32 %v862, %v988
        %v990 = vpop.f32.mrb[0].mxu0
        %991 = vmatprep.mubr.bf16.mxu0 0
        %992 = vmatmul.mubr.bf16.gmra.mrb[0].mxu0 %v910
        %v993 = vpop.f32.mrb[0].mxu0
        %v994 = vadd.f32 %v867, %v993
        %v995 = vpop.f32.mrb[0].mxu0
        %v996 = vpop.f32.mrb[0].mxu0
        %v997 = vadd.f32 %v870, %v996
        %v998 = vpop.f32.mrb[0].mxu0
        %999 = vmatprep.mubr.bf16.mxu0 0
        %1000 = vmatmul.mubr.bf16.gmra.mrb[0].mxu0 %v912
        %v1001 = vpop.f32.mrb[0].mxu0
        %v1002 = vadd.f32 %v875, %v1001
        %v1003 = vpop.f32.mrb[0].mxu0
        %v1004 = vpop.f32.mrb[0].mxu0
        %v1005 = vadd.f32 %v878, %v1004
        %v1006 = vpop.f32.mrb[0].mxu0
        %1007 = vmatprep.mubr.bf16.mxu0 0
        %1008 = vmatmul.mubr.bf16.gmra.mrb[0].mxu0 %v914
        %v1009 = vpop.f32.mrb[0].mxu0
        %v1010 = vadd.f32 %v883, %v1009
        %v1011 = vpop.f32.mrb[0].mxu0
        %v1012 = vpop.f32.mrb[0].mxu0
        %v1013 = vadd.f32 %v886, %v1012
        %v1014 = vpop.f32.mrb[0].mxu0
        %1015 = vdwg.mxu0
        %s1016 = scalar_lea.vmem %s194, 24
        %v1017 = vld [vmem:[%s1016] sm:$0xf]
        %v1018 = vld [vmem:[%s1016 + $0x4] sm:$0xf]
        %v1019 = vld [vmem:[%s1016 + $0x8] sm:$0x1]
        %v1020 = vld [vmem:[%s1016 + $0xc] sm:$0xf]
        %v1021 = vld [vmem:[%s1016 + $0x10] sm:$0xf]
        %v1022 = vld [vmem:[%s1016 + $0x14] sm:$0x1]
        %v1023 = vld [vmem:[%s1016 + $0x18] sm:$0xf]
        %v1024 = vld [vmem:[%s1016 + $0x1c] sm:$0xf]
        %v1025 = vld [vmem:[%s1016 + $0x20] sm:$0x1]
        %v1026 = vld [vmem:[%s1016 + $0x24] sm:$0xf]
        %v1027 = vld [vmem:[%s1016 + $0x28] sm:$0xf]
        %v1028 = vld [vmem:[%s1016 + $0x2c] sm:$0x1]
        %v1029 = vld [vmem:[%s1016 + $0x30] sm:$0xf]
        %v1030 = vld [vmem:[%s1016 + $0x34] sm:$0xf]
        %v1031 = vld [vmem:[%s1016 + $0x38] sm:$0x1]
        %v1032 = vld [vmem:[%s1016 + $0x3c] sm:$0xf]
        %v1033 = vld [vmem:[%s1016 + $0x40] sm:$0xf]
        %v1034 = vld [vmem:[%s1016 + $0x44] sm:$0x1]
        %v1035 = vld [vmem:[%s1016 + $0x48] sm:$0xf]
        %v1036 = vld [vmem:[%s1016 + $0x4c] sm:$0xf]
        %v1037 = vld [vmem:[%s1016 + $0x50] sm:$0x1]
        %v1038 = vld [vmem:[%s1016 + $0x54] sm:$0xf]
        %v1039 = vld [vmem:[%s1016 + $0x58] sm:$0xf]
        %v1040 = vld [vmem:[%s1016 + $0x5c] sm:$0x1]
        %v1057 = vunpack.c.l.b16 %v1017
        %v1058 = vunpack.c.l.b16 %v1018
        %v1059 = vunpack.c.l.b16 %v1020
        %v1060 = vunpack.c.l.b16 %v1021
        %v1061 = vunpack.c.l.b16 %v1023
        %v1062 = vunpack.c.l.b16 %v1024
        %v1063 = vunpack.c.l.b16 %v1026
        %v1064 = vunpack.c.l.b16 %v1027
        %v1065 = vunpack.c.l.b16 %v1029
        %v1066 = vunpack.c.l.b16 %v1030
        %v1067 = vunpack.c.l.b16 %v1032
        %v1068 = vunpack.c.l.b16 %v1033
        %v1069 = vunpack.c.l.b16 %v1035
        %v1070 = vunpack.c.l.b16 %v1036
        %v1071 = vunpack.c.l.b16 %v1038
        %v1072 = vunpack.c.l.b16 %v1039
        %v1073 = vpack.c.b16 %v1058, %v1057
        %v1074 = vpack.c.b16 %v1060, %v1059
        %v1075 = vpack.c.b16 %v1062, %v1061
        %v1076 = vpack.c.b16 %v1064, %v1063
        %v1077 = vpack.c.b16 %v1066, %v1065
        %v1078 = vpack.c.b16 %v1068, %v1067
        %v1079 = vpack.c.b16 %v1070, %v1069
        %v1080 = vpack.c.b16 %v1072, %v1071
        %v1089 = vunpack.c.l.b16 %v1019
        %v1090 = vunpack.c.l.b16 %v1022
        %v1091 = vunpack.c.l.b16 %v1025
        %v1092 = vunpack.c.l.b16 %v1028
        %v1093 = vunpack.c.l.b16 %v1031
        %v1094 = vunpack.c.l.b16 %v1034
        %v1095 = vunpack.c.l.b16 %v1037
        %v1096 = vunpack.c.l.b16 %v1040
        %v1097 = vpack.c.b16 %v1089, %v1089
        %v1098 = vpack.c.b16 %v1090, %v1090
        %v1099 = vpack.c.b16 %v1091, %v1091
        %v1100 = vpack.c.b16 %v1092, %v1092
        %v1101 = vpack.c.b16 %v1093, %v1093
        %v1102 = vpack.c.b16 %v1094, %v1094
        %v1103 = vpack.c.b16 %v1095, %v1095
        %v1104 = vpack.c.b16 %v1096, %v1096
        %v1106 = vshrl.u32 %v1073, 16
        %v1108 = vshll.u32 %v1073, 16
        %v1110 = vrot.slane %v1108, 1
        %v1111 = vor.u32 %v1106, %v1110
        %v1113 = vshll.u32 %v1097, 16
        %v1115 = vrot.slane %v1113, 1
        %v1116 = vsel %vm287, %v1111, %v1115
        %v1118 = vshrl.u32 %v1074, 16
        %v1120 = vshll.u32 %v1074, 16
        %v1122 = vrot.slane %v1120, 1
        %v1123 = vor.u32 %v1118, %v1122
        %v1125 = vshll.u32 %v1098, 16
        %v1127 = vrot.slane %v1125, 1
        %v1128 = vsel %vm287, %v1123, %v1127
        %v1130 = vshrl.u32 %v1075, 16
        %v1132 = vshll.u32 %v1075, 16
        %v1134 = vrot.slane %v1132, 1
        %v1135 = vor.u32 %v1130, %v1134
        %v1137 = vshll.u32 %v1099, 16
        %v1139 = vrot.slane %v1137, 1
        %v1140 = vsel %vm287, %v1135, %v1139
        %v1142 = vshrl.u32 %v1076, 16
        %v1144 = vshll.u32 %v1076, 16
        %v1146 = vrot.slane %v1144, 1
        %v1147 = vor.u32 %v1142, %v1146
        %v1149 = vshll.u32 %v1100, 16
        %v1151 = vrot.slane %v1149, 1
        %v1152 = vsel %vm287, %v1147, %v1151
        %v1154 = vshrl.u32 %v1077, 16
        %v1156 = vshll.u32 %v1077, 16
        %v1158 = vrot.slane %v1156, 1
        %v1159 = vor.u32 %v1154, %v1158
        %v1161 = vshll.u32 %v1101, 16
        %v1163 = vrot.slane %v1161, 1
        %v1164 = vsel %vm287, %v1159, %v1163
        %v1166 = vshrl.u32 %v1078, 16
        %v1168 = vshll.u32 %v1078, 16
        %v1170 = vrot.slane %v1168, 1
        %v1171 = vor.u32 %v1166, %v1170
        %v1173 = vshll.u32 %v1102, 16
        %v1175 = vrot.slane %v1173, 1
        %v1176 = vsel %vm287, %v1171, %v1175
        %v1178 = vshrl.u32 %v1079, 16
        %v1180 = vshll.u32 %v1079, 16
        %v1182 = vrot.slane %v1180, 1
        %v1183 = vor.u32 %v1178, %v1182
        %v1185 = vshll.u32 %v1103, 16
        %v1187 = vrot.slane %v1185, 1
        %v1188 = vsel %vm287, %v1183, %v1187
        %v1190 = vshrl.u32 %v1080, 16
        %v1192 = vshll.u32 %v1080, 16
        %v1194 = vrot.slane %v1192, 1
        %v1195 = vor.u32 %v1190, %v1194
        %v1197 = vshll.u32 %v1104, 16
        %v1199 = vrot.slane %v1197, 1
        %v1200 = vsel %vm287, %v1195, %v1199
        %1201 = vrot.lane.b32.xlu0 %v1116, 9
        %v1202 = vpop.permute.xlu0 %1201
        %1203 = vrot.lane.b32.xlu0 %v1128, 9
        %v1204 = vpop.permute.xlu0 %1203
        %1205 = vrot.lane.b32.xlu0 %v1140, 9
        %v1206 = vpop.permute.xlu0 %1205
        %1207 = vrot.lane.b32.xlu0 %v1152, 9
        %v1208 = vpop.permute.xlu0 %1207
        %1209 = vrot.lane.b32.xlu0 %v1164, 9
        %v1210 = vpop.permute.xlu0 %1209
        %1211 = vrot.lane.b32.xlu0 %v1176, 9
        %v1212 = vpop.permute.xlu0 %1211
        %1213 = vrot.lane.b32.xlu0 %v1188, 9
        %v1214 = vpop.permute.xlu0 %1213
        %1215 = vrot.lane.b32.xlu0 %v1200, 9
        %v1216 = vpop.permute.xlu0 %1215
        %v1217 = vrot.slane %v1073, 1
        %v1218 = vrot.slane %v1097, 1
        %v1219 = vsel %vm400, %v1217, %v1218
        %v1220 = vrot.slane %v1074, 1
        %v1221 = vrot.slane %v1098, 1
        %v1222 = vsel %vm400, %v1220, %v1221
        %v1223 = vrot.slane %v1075, 1
        %v1224 = vrot.slane %v1099, 1
        %v1225 = vsel %vm400, %v1223, %v1224
        %v1226 = vrot.slane %v1076, 1
        %v1227 = vrot.slane %v1100, 1
        %v1228 = vsel %vm400, %v1226, %v1227
        %v1229 = vrot.slane %v1077, 1
        %v1230 = vrot.slane %v1101, 1
        %v1231 = vsel %vm400, %v1229, %v1230
        %v1232 = vrot.slane %v1078, 1
        %v1233 = vrot.slane %v1102, 1
        %v1234 = vsel %vm400, %v1232, %v1233
        %v1235 = vrot.slane %v1079, 1
        %v1236 = vrot.slane %v1103, 1
        %v1237 = vsel %vm400, %v1235, %v1236
        %v1238 = vrot.slane %v1080, 1
        %v1239 = vrot.slane %v1104, 1
        %v1240 = vsel %vm400, %v1238, %v1239
        %1241 = vrot.lane.b32.xlu0 %v1219, 18
        %v1242 = vpop.permute.xlu0 %1241
        %1243 = vrot.lane.b32.xlu0 %v1222, 18
        %v1244 = vpop.permute.xlu0 %1243
        %1245 = vrot.lane.b32.xlu0 %v1225, 18
        %v1246 = vpop.permute.xlu0 %1245
        %1247 = vrot.lane.b32.xlu0 %v1228, 18
        %v1248 = vpop.permute.xlu0 %1247
        %1249 = vrot.lane.b32.xlu0 %v1231, 18
        %v1250 = vpop.permute.xlu0 %1249
        %1251 = vrot.lane.b32.xlu0 %v1234, 18
        %v1252 = vpop.permute.xlu0 %1251
        %1253 = vrot.lane.b32.xlu0 %v1237, 18
        %v1254 = vpop.permute.xlu0 %1253
        %1255 = vrot.lane.b32.xlu0 %v1240, 18
        %v1256 = vpop.permute.xlu0 %1255
        %v1258 = vsel %vm441, %v1073, %v1202
        %v1260 = vsel %vm441, %v1074, %v1204
        %v1262 = vsel %vm441, %v1075, %v1206
        %v1264 = vsel %vm441, %v1076, %v1208
        %v1266 = vsel %vm441, %v1077, %v1210
        %v1268 = vsel %vm441, %v1078, %v1212
        %v1270 = vsel %vm441, %v1079, %v1214
        %v1272 = vsel %vm441, %v1080, %v1216
        %v1274 = vsel %vm458, %v1258, %v1242
        %v1276 = vsel %vm458, %v1260, %v1244
        %v1278 = vsel %vm458, %v1262, %v1246
        %v1280 = vsel %vm458, %v1264, %v1248
        %v1282 = vsel %vm458, %v1266, %v1250
        %v1284 = vsel %vm458, %v1268, %v1252
        %v1286 = vsel %vm458, %v1270, %v1254
        %v1288 = vsel %vm458, %v1272, %v1256
        %s1289 = scalar_lea.vmem %s1, 32
        %v1290 = vld [vmem:[%s1289] sm:$0xf]
        %v1291 = vld [vmem:[%s1289 + $0x4] sm:$0xf]
        %v1292 = vld [vmem:[%s1289 + $0x8] sm:$0xf]
        %v1293 = vld [vmem:[%s1289 + $0xc] sm:$0x3]
        %v1298 = vunpack.c.l.b16 %v1290
        %v1299 = vunpack.c.l.b16 %v1291
        %v1300 = vunpack.c.l.b16 %v1292
        %v1301 = vunpack.c.l.b16 %v1293
        %v1302 = vpack.c.b16 %v1299, %v1298
        %v1303 = vpack.c.b16 %v1301, %v1300
        %v1305 = vsel %vm768, %v1274, 0
        %v1307 = vsel %vm768, %v1276, 0
        %v1309 = vsel %vm768, %v1278, 0
        %v1311 = vsel %vm768, %v1280, 0
        %v1313 = vsel %vm768, %v1282, 0
        %v1315 = vsel %vm768, %v1284, 0
        %v1317 = vsel %vm768, %v1286, 0
        %v1319 = vsel %vm768, %v1288, 0
        %v1322 = vand.u32 %v1303, %v788
        %1324 = vmatprep.subr.bf16.mxu0 0
        %1325 = vmatpush1.bf16.msra.mxu0 %v1302
        %1326 = vmatprep.subr.bf16.mxu0 0
        %1327 = vmatpush1.bf16.msra.mxu0 %v1322
        %1328 = vmatprep.subr.bf16.mxu0 0
        %1329 = vmatpush1.bf16.msra.mxu0 0
        %1330 = vmatprep.subr.bf16.mxu0 0
        %1331 = vmatpush1.bf16.msra.mxu0 0
        %1332 = vmatprep.subr.bf16.mxu0 0
        %1333 = vmatpush1.bf16.msra.mxu0 0
        %1334 = vmatprep.subr.bf16.mxu0 0
        %1335 = vmatpush1.bf16.msra.mxu0 0
        %1336 = vmatprep.subr.bf16.mxu0 0
        %1337 = vmatpush1.bf16.msra.mxu0 0
        %1338 = vmatprep.subr.bf16.mxu0 0
        %1339 = vmatpush1.bf16.msra.mxu0 0
        %1340 = vmatprep.subr.bf16.mxu0 0
        %1341 = vmatpush1.bf16.msra.mxu0 0
        %1342 = vmatprep.subr.bf16.mxu0 0
        %1343 = vmatpush1.bf16.msra.mxu0 0
        %1344 = vmatprep.subr.bf16.mxu0 0
        %1345 = vmatpush1.bf16.msra.mxu0 0
        %1346 = vmatprep.subr.bf16.mxu0 0
        %1347 = vmatpush1.bf16.msra.mxu0 0
        %1348 = vmatprep.subr.bf16.mxu0 0
        %1349 = vmatpush1.bf16.msra.mxu0 0
        %1350 = vmatprep.subr.bf16.mxu0 0
        %1351 = vmatpush1.bf16.msra.mxu0 0
        %1352 = vmatprep.subr.bf16.mxu0 0
        %1353 = vmatpush1.bf16.msra.mxu0 0
        %1354 = vmatprep.subr.bf16.mxu0 0
        %1355 = vmatpush1.bf16.msra.mxu0 0
        %1356 = vmatprep.mubr.bf16.mxu0 0
        %1357 = vmatmul.mubr.bf16.gmra.mrb[0].mxu0 %v1305
        %v1358 = vpop.f32.mrb[0].mxu0
        %v1359 = vadd.f32 0.0, %v1358
        %v1360 = vpop.f32.mrb[0].mxu0
        %v1361 = vpop.f32.mrb[0].mxu0
        %v1362 = vadd.f32 0.0, %v1361
        %v1363 = vpop.f32.mrb[0].mxu0
        %1364 = vmatprep.mubr.bf16.mxu0 0
        %1365 = vmatmul.mubr.bf16.gmra.mrb[0].mxu0 %v1307
        %v1366 = vpop.f32.mrb[0].mxu0
        %v1367 = vadd.f32 0.0, %v1366
        %v1368 = vpop.f32.mrb[0].mxu0
        %v1369 = vpop.f32.mrb[0].mxu0
        %v1370 = vadd.f32 0.0, %v1369
        %v1371 = vpop.f32.mrb[0].mxu0
        %1372 = vmatprep.mubr.bf16.mxu0 0
        %1373 = vmatmul.mubr.bf16.gmra.mrb[0].mxu0 %v1309
        %v1374 = vpop.f32.mrb[0].mxu0
        %v1375 = vadd.f32 0.0, %v1374
        %v1376 = vpop.f32.mrb[0].mxu0
        %v1377 = vpop.f32.mrb[0].mxu0
        %v1378 = vadd.f32 0.0, %v1377
        %v1379 = vpop.f32.mrb[0].mxu0
        %1380 = vmatprep.mubr.bf16.mxu0 0
        %1381 = vmatmul.mubr.bf16.gmra.mrb[0].mxu0 %v1311
        %v1382 = vpop.f32.mrb[0].mxu0
        %v1383 = vadd.f32 0.0, %v1382
        %v1384 = vpop.f32.mrb[0].mxu0
        %v1385 = vpop.f32.mrb[0].mxu0
        %v1386 = vadd.f32 0.0, %v1385
        %v1387 = vpop.f32.mrb[0].mxu0
        %1388 = vmatprep.mubr.bf16.mxu0 0
        %1389 = vmatmul.mubr.bf16.gmra.mrb[0].mxu0 %v1313
        %v1390 = vpop.f32.mrb[0].mxu0
        %v1391 = vadd.f32 0.0, %v1390
        %v1392 = vpop.f32.mrb[0].mxu0
        %v1393 = vpop.f32.mrb[0].mxu0
        %v1394 = vadd.f32 0.0, %v1393
        %v1395 = vpop.f32.mrb[0].mxu0
        %1396 = vmatprep.mubr.bf16.mxu0 0
        %1397 = vmatmul.mubr.bf16.gmra.mrb[0].mxu0 %v1315
        %v1398 = vpop.f32.mrb[0].mxu0
        %v1399 = vadd.f32 0.0, %v1398
        %v1400 = vpop.f32.mrb[0].mxu0
        %v1401 = vpop.f32.mrb[0].mxu0
        %v1402 = vadd.f32 0.0, %v1401
        %v1403 = vpop.f32.mrb[0].mxu0
        %1404 = vmatprep.mubr.bf16.mxu0 0
        %1405 = vmatmul.mubr.bf16.gmra.mrb[0].mxu0 %v1317
        %v1406 = vpop.f32.mrb[0].mxu0
        %v1407 = vadd.f32 0.0, %v1406
        %v1408 = vpop.f32.mrb[0].mxu0
        %v1409 = vpop.f32.mrb[0].mxu0
        %v1410 = vadd.f32 0.0, %v1409
        %v1411 = vpop.f32.mrb[0].mxu0
        %1412 = vmatprep.mubr.bf16.mxu0 0
        %1413 = vmatmul.mubr.bf16.gmra.mrb[0].mxu0 %v1319
        %v1414 = vpop.f32.mrb[0].mxu0
        %v1415 = vadd.f32 0.0, %v1414
        %v1416 = vpop.f32.mrb[0].mxu0
        %v1417 = vpop.f32.mrb[0].mxu0
        %v1418 = vadd.f32 0.0, %v1417
        %v1419 = vpop.f32.mrb[0].mxu0
        %1420 = vdwg.mxu0
        %v1421 = vadd.f32 %v954, %v1359
        %v1422 = vadd.f32 %v957, %v1362
        %v1423 = vadd.f32 %v962, %v1367
        %v1424 = vadd.f32 %v965, %v1370
        %v1425 = vadd.f32 %v970, %v1375
        %v1426 = vadd.f32 %v973, %v1378
        %v1427 = vadd.f32 %v978, %v1383
        %v1428 = vadd.f32 %v981, %v1386
        %v1429 = vadd.f32 %v986, %v1391
        %v1430 = vadd.f32 %v989, %v1394
        %v1431 = vadd.f32 %v994, %v1399
        %v1432 = vadd.f32 %v997, %v1402
        %v1433 = vadd.f32 %v1002, %v1407
        %v1434 = vadd.f32 %v1005, %v1410
        %v1435 = vadd.f32 %v1010, %v1415
        %v1436 = vadd.f32 %v1013, %v1418
        %v1437 = vld [vmem:[%s2] sm:$0x1]
        %v1439 = vlaneseq
        %v1440 = vshrl.u32 %v1439, 7
        %v1441 = vsub.s32 0, %v1440
        %v1442 = vrot.slane %v1437, %v1441
        %v1444 = vadd.f32 %v1421, %v1442
        %v1445 = vadd.f32 %v1422, %v1442
        %v1446 = vadd.f32 %v1423, %v1442
        %v1447 = vadd.f32 %v1424, %v1442
        %v1448 = vadd.f32 %v1425, %v1442
        %v1449 = vadd.f32 %v1426, %v1442
        %v1450 = vadd.f32 %v1427, %v1442
        %v1451 = vadd.f32 %v1428, %v1442
        %v1452 = vadd.f32 %v1429, %v1442
        %v1453 = vadd.f32 %v1430, %v1442
        %v1454 = vadd.f32 %v1431, %v1442
        %v1455 = vadd.f32 %v1432, %v1442
        %v1456 = vadd.f32 %v1433, %v1442
        %v1457 = vadd.f32 %v1434, %v1442
        %v1458 = vadd.f32 %v1435, %v1442
        %v1459 = vadd.f32 %v1436, %v1442
        %vm1460 = vcmp.ge.f32.partialorder %v1444, 0.0
        %vm1461 = vcmp.ge.f32.partialorder %v1445, 0.0
        %vm1462 = vcmp.ge.f32.partialorder %v1446, 0.0
        %vm1463 = vcmp.ge.f32.partialorder %v1447, 0.0
        %vm1464 = vcmp.ge.f32.partialorder %v1448, 0.0
        %vm1465 = vcmp.ge.f32.partialorder %v1449, 0.0
        %vm1466 = vcmp.ge.f32.partialorder %v1450, 0.0
        %vm1467 = vcmp.ge.f32.partialorder %v1451, 0.0
        %vm1468 = vcmp.ge.f32.partialorder %v1452, 0.0
        %vm1469 = vcmp.ge.f32.partialorder %v1453, 0.0
        %vm1470 = vcmp.ge.f32.partialorder %v1454, 0.0
        %vm1471 = vcmp.ge.f32.partialorder %v1455, 0.0
        %vm1472 = vcmp.ge.f32.partialorder %v1456, 0.0
        %vm1473 = vcmp.ge.f32.partialorder %v1457, 0.0
        %vm1474 = vcmp.ge.f32.partialorder %v1458, 0.0
        %vm1475 = vcmp.ge.f32.partialorder %v1459, 0.0
        %v1476 = vmul.f32 %v1444, 0.1
        %v1477 = vmul.f32 %v1445, 0.1
        %v1478 = vmul.f32 %v1446, 0.1
        %v1479 = vmul.f32 %v1447, 0.1
        %v1480 = vmul.f32 %v1448, 0.1
        %v1481 = vmul.f32 %v1449, 0.1
        %v1482 = vmul.f32 %v1450, 0.1
        %v1483 = vmul.f32 %v1451, 0.1
        %v1484 = vmul.f32 %v1452, 0.1
        %v1485 = vmul.f32 %v1453, 0.1
        %v1486 = vmul.f32 %v1454, 0.1
        %v1487 = vmul.f32 %v1455, 0.1
        %v1488 = vmul.f32 %v1456, 0.1
        %v1489 = vmul.f32 %v1457, 0.1
        %v1490 = vmul.f32 %v1458, 0.1
        %v1491 = vmul.f32 %v1459, 0.1
        %v1492 = vsel %vm1460, %v1444, %v1476
        %v1493 = vsel %vm1461, %v1445, %v1477
        %v1494 = vsel %vm1462, %v1446, %v1478
        %v1495 = vsel %vm1463, %v1447, %v1479
        %v1496 = vsel %vm1464, %v1448, %v1480
        %v1497 = vsel %vm1465, %v1449, %v1481
        %v1498 = vsel %vm1466, %v1450, %v1482
        %v1499 = vsel %vm1467, %v1451, %v1483
        %v1500 = vsel %vm1468, %v1452, %v1484
        %v1501 = vsel %vm1469, %v1453, %v1485
        %v1502 = vsel %vm1470, %v1454, %v1486
        %v1503 = vsel %vm1471, %v1455, %v1487
        %v1504 = vsel %vm1472, %v1456, %v1488
        %v1505 = vsel %vm1473, %v1457, %v1489
        %v1506 = vsel %vm1474, %v1458, %v1490
        %v1507 = vsel %vm1475, %v1459, %v1491
        %1508 = vst [vmem:[%s187] sm:$0xff] %v1492
        %1509 = vst [vmem:[%s187 + $0x8] sm:$0xff] %v1493
        %1510 = vst [vmem:[%s187 + $0x10] sm:$0xff] %v1494
        %1511 = vst [vmem:[%s187 + $0x18] sm:$0xff] %v1495
        %1512 = vst [vmem:[%s187 + $0x20] sm:$0xff] %v1496
        %1513 = vst [vmem:[%s187 + $0x28] sm:$0xff] %v1497
        %1514 = vst [vmem:[%s187 + $0x30] sm:$0xff] %v1498
        %1515 = vst [vmem:[%s187 + $0x38] sm:$0xff] %v1499
        %1516 = vst [vmem:[%s187 + $0x40] sm:$0xff] %v1500
        %1517 = vst [vmem:[%s187 + $0x48] sm:$0xff] %v1501
        %1518 = vst [vmem:[%s187 + $0x50] sm:$0xff] %v1502
        %1519 = vst [vmem:[%s187 + $0x58] sm:$0xff] %v1503
        %1520 = vst [vmem:[%s187 + $0x60] sm:$0xff] %v1504
        %1521 = vst [vmem:[%s187 + $0x68] sm:$0xff] %v1505
        %1522 = vst [vmem:[%s187 + $0x70] sm:$0xff] %v1506
        %1523 = vst [vmem:[%s187 + $0x78] sm:$0xff] %v1507
        %s1524 = sand.u32 %s111, 1
        %s1525 = scalar_lea.sflag [#allocation3], %s1524
        %s1526 = sand.u32 %s111, 1
        %s1527 = smul.addr %s1526, 128
        %s1528 = scalar_lea.vmem [#allocation2], %s1527
        // Predicated region
        $region33: #{conv_module_forward.1} parent=31 // pred_check
          %p1529 = pneg %p121
        $region34: #{conv_module_forward.1} parent=31 // pred_check_branch
          %1531 = sbr.rel (%p1529) target = $region36
        $region35: #{conv_module_forward.1} parent=31 // pred_region
          %s1532 = smul.u32 16, %s22
          %s1534 = ssub.s32 2048, 2048
          %1535 = vsyncadd %s1525, %s1534
          %s1536 = smul.addr %s21, 32
          %s1537 = sadd.s32 %s1532, %s1536
          %s1538 = smul.addr %s1537, 128
          %s1539 = scalar_lea.hbm %s3, %s1538
          %s1540 = sshll.u32 %s1528, 4
          %s1541 = int_to_ptr.vmem [resolvable:$true] %s1540
          %1546 = dma.vmem_to_hbm [thread:$0]  %s1541, 2048, %s1539, %s1525, 128, 128, 8
        $region36: #{conv_module_forward.1} parent=31 // pred_fallthru
          _
      $region32: #{conv_module_forward.1} parent=5 // pred_fallthru
        _
      %p1547 = scmp.le.s32.totalorder 2, %s12
      // Predicated region
      $region37: #{conv_module_forward.1} parent=5 // pred_check
        %p1548 = pneg %p1547
      $region38: #{conv_module_forward.1} parent=5 // pred_check_branch
        %1550 = sbr.rel (%p1548) target = $region40
      $region39: #{conv_module_forward.1} parent=5 // pred_region
        %s1551 = ssub.s32 %s12, 2
        // Predicated region
        $region41: #{conv_module_forward.1} parent=39 // pred_check
          %p1552 = pneg %p127
        $region42: #{conv_module_forward.1} parent=39 // pred_check_branch
          %1554 = sbr.rel (%p1552) target = $region44
        $region43: #{conv_module_forward.1} parent=39 // pred_region
          %s1555 = sand.u32 %s112, 1
          %s1556 = scalar_lea.sflag [#allocation3], %s1555
          %s1557 = sand.u32 %s112, 1
          %s1558 = smul.addr %s1557, 128
          %s1559 = scalar_lea.vmem [#allocation2], %s1558
          %1560 = dma.done %s1556, 2048
        $region44: #{conv_module_forward.1} parent=39 // pred_fallthru
          _
      $region40: #{conv_module_forward.1} parent=5 // pred_fallthru
        _
    $region6: #{conv_module_forward.1} parent=1 // loop_footer
      %s16 = sadd.s32 1, %s12
    $region7: #{conv_module_forward.1} parent=1 // loop_footer_branch
      %11 = sbr.rel target = $region3
    $region8: #{conv_module_forward.1} parent=1 // loop_exit
      _
    %1561 = vsyncpa [#allocation3], 1
    %s1562 = scalar_lea.sflag [#allocation3], 1
    %1563 = vsyncpa %s1562, 1

</llo_original>
